<compile_context>
chip_gen: v5e
topology: v5e:2x2
jax: 0.10.0
libtpu: 0.0.40
codegen_flags: <defaults>
</compile_context>

<pallas_src>
import math

import jax
import jax.numpy as jnp
from jax.experimental import pallas as pl
from jax.experimental.pallas import tpu as pltpu


EMB_DIM = 64
IN_DIM = 2 * EMB_DIM   # 128, lane-dense concat of user+item embeddings
H1 = 64
H2 = 32
DEFAULT_BLOCK_B = 8192        # rows per grid step (~2 MiB bf16 activations)
VMEM_LIMIT_BYTES = 32 * 1024 * 1024


def _round_up(x, m):
    return (x + m - 1) // m * m


def _pick_tile(batch, block_b):
    """Batch tile: multiple of 16 (bf16 sublane packing). For large batches,
    keep >= 4 grid steps (megacore split + pipeline depth) but each step
    >= 2048 rows so per-step pipeline overhead stays amortized."""
    block_b = _round_up(block_b, 16)
    if batch <= block_b:
        return _round_up(max(batch, 16), 16)
    tb = max(2048, -(-batch // 4))
    return min(block_b, _round_up(tb, 16))


def ncf_mlp_kernel(x_ref, w1_ref, b1_ref, w2_ref, b2_ref, w3_ref, b3_ref, o_ref):
    x = x_ref[...]                                        # (TB, 128) bf16

    # fc1: single K=128 bf16 MXU dot with f32 accumulation.
    h1 = jnp.dot(x, w1_ref[...], preferred_element_type=jnp.float32)
    h1 = jnp.maximum(h1 + b1_ref[...], 0.0)               # (TB, 64) f32

    # fc2: bf16 MXU inputs, f32 accumulation.
    h2 = jnp.dot(h1.astype(jnp.bfloat16), w2_ref[...],
                 preferred_element_type=jnp.float32)
    h2 = jnp.maximum(h2 + b2_ref[...], 0.0)               # (TB, 32) f32

    # fc3 (K=32, N=1): VPU multiply + lane reduction instead of an Nx1 matmul.
    logits = jnp.sum(h2 * w3_ref[...], axis=-1, keepdims=True) + b3_ref[0, 0]

    o_ref[...] = jax.nn.sigmoid(logits)                   # (TB, 1) f32


def ncf_forward(params, users, items, *, block_b=DEFAULT_BLOCK_B):
    """users, items: int32 [B].  Returns sigmoid scores [B] (float32)."""
    B = users.shape[0]

    tb = _pick_tile(B, block_b)
    Bp = _round_up(B, tb)
    if Bp != B:
        pad = Bp - B
        users = jnp.concatenate([users, jnp.zeros((pad,), users.dtype)])
        items = jnp.concatenate([items, jnp.zeros((pad,), items.dtype)])

    # --- glue: embedding gather + concat into one lane-dense (Bp, 128) bf16
    # array (fused by XLA next to the gather; no extra HBM pass). ---
    x = jnp.concatenate(
        [params["user_emb"][users], params["item_emb"][items]], axis=1)

    n_tiles = Bp // tb
    w_spec = lambda shape: pl.BlockSpec(shape, lambda i: (0, 0))  # VMEM-resident

    out = pl.pallas_call(
        ncf_mlp_kernel,
        out_shape=jax.ShapeDtypeStruct((Bp, 1), jnp.float32),
        grid_spec=pltpu.PrefetchScalarGridSpec(
            num_scalar_prefetch=0,
            grid=(n_tiles,),
            in_specs=[
                pl.BlockSpec((tb, IN_DIM), lambda i: (i, 0)),       # x tile
                w_spec((IN_DIM, H1)),                               # W1 bf16
                w_spec((1, H1)),                                    # b1 f32
                w_spec((H1, H2)),                                   # W2 bf16
                w_spec((1, H2)),                                    # b2 f32
                w_spec((1, H2)),                                    # W3 row f32
                pl.BlockSpec(memory_space=pltpu.MemorySpace.SMEM),  # b3 scalar
            ],
            out_specs=pl.BlockSpec((tb, 1), lambda i: (i, 0)),
        ),
        compiler_params=pltpu.CompilerParams(
            dimension_semantics=("parallel",),       # v7x: both TensorCores
            vmem_limit_bytes=VMEM_LIMIT_BYTES),
    )(x,
      params["w1"], params["b1"],
      params["w2"], params["b2"],
      params["w3_row"], params["b3"])

    # torch .squeeze() on (B, 1) -> (B,); drop padded rows.
    return out[:B, 0]


def xavier_uniform(key, shape):
    # PyTorch xavier_uniform_: fan_out = shape[0], fan_in = shape[1] for 2D.
    fan_out, fan_in = shape
    bound = math.sqrt(6.0 / (fan_in + fan_out))
    return jax.random.uniform(key, shape, jnp.float32, -bound, bound)


def init_params(key, n_users, n_items, emb_dim=EMB_DIM):
    keys = jax.random.split(key, 5)
    user_emb = xavier_uniform(keys[0], (n_users, emb_dim))
    item_emb = xavier_uniform(keys[1], (n_items, emb_dim))
    # PyTorch Linear weight shape is (out, in); store transposed (in, out).
    w1 = xavier_uniform(keys[2], (H1, 2 * emb_dim)).T          # (128, 64)
    w2 = xavier_uniform(keys[3], (H2, H1)).T                   # (64, 32)
    w3 = xavier_uniform(keys[4], (1, H2))                      # (1, 32) row
    return {
        # bf16 tables + bf16 MXU weights: halves HBM bytes, native MXU inputs.
        "user_emb": user_emb.astype(jnp.bfloat16),
        "item_emb": item_emb.astype(jnp.bfloat16),
        "w1": w1.astype(jnp.bfloat16),
        "b1": jnp.zeros((1, H1), jnp.float32),
        "w2": w2.astype(jnp.bfloat16),
        "b2": jnp.zeros((1, H2), jnp.float32),
        "w3_row": w3,                                  # f32: VPU path, not MXU
        "b3": jnp.zeros((1, 1), jnp.float32),
    }


def ncf_reference(params, users, items):
    """Pure-JAX reference with the same dtypes/accumulation as the kernel."""
    x = jnp.concatenate(
        [params["user_emb"][users], params["item_emb"][items]], axis=1)
    h1 = jnp.maximum(
        jnp.dot(x, params["w1"], preferred_element_type=jnp.float32)
        + params["b1"], 0.0)
    h2 = jnp.maximum(
        jnp.dot(h1.astype(jnp.bfloat16), params["w2"],
                preferred_element_type=jnp.float32) + params["b2"], 0.0)
    logits = jnp.sum(h2 * params["w3_row"], axis=-1, keepdims=True) \
        + params["b3"][0, 0]
    return jax.nn.sigmoid(logits)[:, 0]


if __name__ == "__main__":
    key = jax.random.PRNGKey(0)
    n_users, n_items = 50, 100
    batch = 8

    pkey, ukey, ikey = jax.random.split(key, 3)
    params = init_params(pkey, n_users, n_items)

    users = jax.random.randint(ukey, (batch,), 0, n_users, dtype=jnp.int32)
    items = jax.random.randint(ikey, (batch,), 0, n_items, dtype=jnp.int32)

    out = jax.block_until_ready(ncf_forward(params, users, items))
    ref = jax.block_until_ready(ncf_reference(params, users, items))

    assert out.shape == (batch,)
    assert jnp.allclose(out, ref, atol=2e-3, rtol=2e-3), (out, ref)
    print("KERNEL_OK")
</pallas_src>

<mosaic_0001>
module attributes {stable_mosaic.version = 11 : i64} {
  func.func @ncf_mlp_kernel(%arg0: i32, %arg1: memref<16x128xbf16, #tpu.memory_space<vmem>>, %arg2: memref<128x64xbf16, #tpu.memory_space<vmem>>, %arg3: memref<1x64xf32, #tpu.memory_space<vmem>>, %arg4: memref<64x32xbf16, #tpu.memory_space<vmem>>, %arg5: memref<1x32xf32, #tpu.memory_space<vmem>>, %arg6: memref<1x32xf32, #tpu.memory_space<vmem>>, %arg7: memref<1x1xf32, #tpu.memory_space<smem>>, %arg8: memref<16x1xf32, #tpu.memory_space<vmem>>) attributes {dimension_semantics = [#tpu.dimension_semantics<parallel>], iteration_bounds = array<i64: 1>, scalar_prefetch = 0 : i64, scratch_operands = 0 : i64, tpu.core_type = #tpu.core_type<tc>, window_params = [{transform_indices = @transform_0, window_bounds = array<i64: 16, 128>}, {pipeline_mode = #tpu.pipeline_mode<synchronous>, transform_indices = @transform_1, window_bounds = array<i64: 128, 64>}, {pipeline_mode = #tpu.pipeline_mode<synchronous>, transform_indices = @transform_2, window_bounds = array<i64: 1, 64>}, {pipeline_mode = #tpu.pipeline_mode<synchronous>, transform_indices = @transform_3, window_bounds = array<i64: 64, 32>}, {pipeline_mode = #tpu.pipeline_mode<synchronous>, transform_indices = @transform_4, window_bounds = array<i64: 1, 32>}, {pipeline_mode = #tpu.pipeline_mode<synchronous>, transform_indices = @transform_5, window_bounds = array<i64: 1, 32>}, {transform_indices = @transform_6, window_bounds = array<i64: 1, 1>}, {transform_indices = @transform_7, window_bounds = array<i64: 16, 1>}]} {
    %c0 = arith.constant 0 : index
    %c0_0 = arith.constant 0 : index
    %0 = vector.load %arg1[%c0, %c0_0] : memref<16x128xbf16, #tpu.memory_space<vmem>>, vector<16x128xbf16>
    %c0_1 = arith.constant 0 : index
    %c0_2 = arith.constant 0 : index
    %1 = vector.load %arg2[%c0_1, %c0_2] : memref<128x64xbf16, #tpu.memory_space<vmem>>, vector<128x64xbf16>
    %cst = arith.constant dense<0.000000e+00> : vector<16x64xf32>
    %2 = tpu.matmul %0, %1, %cst {dimension_numbers = #tpu.dot_dimension_numbers<[1], [0], [0], [1], [0, 0, 1, 1], [], []>} : vector<16x128xbf16>, vector<128x64xbf16>, vector<16x64xf32> -> vector<16x64xf32>
    %c0_3 = arith.constant 0 : index
    %c0_4 = arith.constant 0 : index
    %3 = vector.load %arg3[%c0_3, %c0_4] : memref<1x64xf32, #tpu.memory_space<vmem>>, vector<1x64xf32>
    %4 = vector.broadcast %3 : vector<1x64xf32> to vector<16x64xf32>
    %5 = arith.addf %2, %4 : vector<16x64xf32>
    %cst_5 = arith.constant 0.000000e+00 : f32
    %6 = vector.broadcast %cst_5 : f32 to vector<16x64xf32>
    %7 = arith.maximumf %5, %6 : vector<16x64xf32>
    %8 = arith.truncf %7 : vector<16x64xf32> to vector<16x64xbf16>
    %c0_6 = arith.constant 0 : index
    %c0_7 = arith.constant 0 : index
    %9 = vector.load %arg4[%c0_6, %c0_7] : memref<64x32xbf16, #tpu.memory_space<vmem>>, vector<64x32xbf16>
    %cst_8 = arith.constant dense<0.000000e+00> : vector<16x32xf32>
    %10 = tpu.matmul %8, %9, %cst_8 {dimension_numbers = #tpu.dot_dimension_numbers<[1], [0], [0], [1], [0, 0, 1, 1], [], []>} : vector<16x64xbf16>, vector<64x32xbf16>, vector<16x32xf32> -> vector<16x32xf32>
    %c0_9 = arith.constant 0 : index
    %c0_10 = arith.constant 0 : index
    %11 = vector.load %arg5[%c0_9, %c0_10] : memref<1x32xf32, #tpu.memory_space<vmem>>, vector<1x32xf32>
    %12 = vector.broadcast %11 : vector<1x32xf32> to vector<16x32xf32>
    %13 = arith.addf %10, %12 : vector<16x32xf32>
    %cst_11 = arith.constant 0.000000e+00 : f32
    %14 = vector.broadcast %cst_11 : f32 to vector<16x32xf32>
    %15 = arith.maximumf %13, %14 : vector<16x32xf32>
    %c0_12 = arith.constant 0 : index
    %c0_13 = arith.constant 0 : index
    %16 = vector.load %arg6[%c0_12, %c0_13] : memref<1x32xf32, #tpu.memory_space<vmem>>, vector<1x32xf32>
    %17 = vector.broadcast %16 : vector<1x32xf32> to vector<16x32xf32>
    %18 = arith.mulf %15, %17 : vector<16x32xf32>
    %cst_14 = arith.constant dense<0.000000e+00> : vector<16xf32>
    %19 = vector.multi_reduction <add>, %18, %cst_14 [1] : vector<16x32xf32> to vector<16xf32>
    %20 = vector.shape_cast %19 : vector<16xf32> to vector<16x1xf32>
    %c0_15 = arith.constant 0 : index
    %c0_16 = arith.constant 0 : index
    %21 = memref.load %arg7[%c0_15, %c0_16] : memref<1x1xf32, #tpu.memory_space<smem>>
    %22 = vector.broadcast %21 : f32 to vector<16x1xf32>
    %23 = arith.addf %20, %22 : vector<16x1xf32>
    %24 = arith.negf %23 : vector<16x1xf32>
    %25 = math.exp %24 : vector<16x1xf32>
    %cst_17 = arith.constant 1.000000e+00 : f32
    %26 = vector.broadcast %cst_17 : f32 to vector<16x1xf32>
    %27 = arith.addf %26, %25 : vector<16x1xf32>
    %28 = arith.divf %26, %27 : vector<16x1xf32>
    %c0_18 = arith.constant 0 : index
    %c0_19 = arith.constant 0 : index
    %29 = vector.load %arg8[%c0_18, %c0_19] : memref<16x1xf32, #tpu.memory_space<vmem>>, vector<16x1xf32>
    tpu.vector_store %arg8[%c0_18, %c0_19], %28 {strides = array<i32>} : memref<16x1xf32, #tpu.memory_space<vmem>>, vector<16x1xf32>,
    return
  }
  func.func @transform_0(%arg0: i32) -> (i32, i32) {
    %c0_i32 = arith.constant 0 : i32
    %c0_i32_0 = arith.constant 0 : i32
    return %arg0, %c0_i32 : i32, i32
  }
  func.func @transform_1(%arg0: i32) -> (i32, i32) {
    %c0_i32 = arith.constant 0 : i32
    %c0_i32_0 = arith.constant 0 : i32
    %c0_i32_1 = arith.constant 0 : i32
    return %c0_i32, %c0_i32_0 : i32, i32
  }
  func.func @transform_2(%arg0: i32) -> (i32, i32) {
    %c0_i32 = arith.constant 0 : i32
    %c0_i32_0 = arith.constant 0 : i32
    %c0_i32_1 = arith.constant 0 : i32
    return %c0_i32, %c0_i32_0 : i32, i32
  }
  func.func @transform_3(%arg0: i32) -> (i32, i32) {
    %c0_i32 = arith.constant 0 : i32
    %c0_i32_0 = arith.constant 0 : i32
    %c0_i32_1 = arith.constant 0 : i32
    return %c0_i32, %c0_i32_0 : i32, i32
  }
  func.func @transform_4(%arg0: i32) -> (i32, i32) {
    %c0_i32 = arith.constant 0 : i32
    %c0_i32_0 = arith.constant 0 : i32
    %c0_i32_1 = arith.constant 0 : i32
    return %c0_i32, %c0_i32_0 : i32, i32
  }
  func.func @transform_5(%arg0: i32) -> (i32, i32) {
    %c0_i32 = arith.constant 0 : i32
    %c0_i32_0 = arith.constant 0 : i32
    %c0_i32_1 = arith.constant 0 : i32
    return %c0_i32, %c0_i32_0 : i32, i32
  }
  func.func @transform_6(%arg0: i32) -> (i32, i32) {
    %c0_i32 = arith.constant 0 : i32
    %c0_i32_0 = arith.constant 0 : i32
    %c0_i32_1 = arith.constant 0 : i32
    return %c0_i32, %c0_i32_0 : i32, i32
  }
  func.func @transform_7(%arg0: i32) -> (i32, i32) {
    %c0_i32 = arith.constant 0 : i32
    %c0_i32_0 = arith.constant 0 : i32
    return %arg0, %c0_i32 : i32, i32
  }
}

</mosaic_0001>

<llo_original>
// kernel: tpu_custom_call.1
$region0: #{tpu_custom_call.1}
  #allocation0 [shape = 'u32[]', space=smem, size = 0x4, offset = 0x4, fixed_abs, tag = 'smem constant byte address 0x4 - core index']
  #allocation1 [shape = 'u32[72,128]{1,0:T(1,128)}', space=vmem, size = 0x9000, scoped, tag = 'internal scratch']
  #allocation2 [shape = 'f32[1,1]{1,0:T(1,128)S(6)}', space=smem, size = 0x200, scoped, tag = 'scoped memory for tpu_custom_call.1']
  %s0 = inlined_call_operand.vmem [shape: bf16[16,128], index: 0, kind: input, shape index: {}]
  %s1 = inlined_call_operand.vmem [shape: bf16[128,64], index: 1, kind: input, shape index: {}]
  %s2 = inlined_call_operand.vmem [shape: f32[1,64], index: 2, kind: input, shape index: {}]
  %s3 = inlined_call_operand.vmem [shape: bf16[64,32], index: 3, kind: input, shape index: {}]
  %s4 = inlined_call_operand.vmem [shape: f32[1,32], index: 4, kind: input, shape index: {}]
  %s5 = inlined_call_operand.vmem [shape: f32[1,32], index: 5, kind: input, shape index: {}]
  %s6 = inlined_call_operand.<no memory space> [shape: f32[1,1], index: 6, kind: input, shape index: {}]
  %s7 = inlined_call_operand.vmem [shape: f32[16,1], index: 7, kind: output, shape index: {}]
  %s8 = sld [smem:[#allocation0]]
  $region38: #{tpu_custom_call.1} parent=0
    _
  %s10 = ssub.s32 1, %s8
  %s11 = scalar_select 0, %s10, %s8
  %12 = sst [smem:[#allocation2]] %s6
  // Predicated region
  $region2: #{tpu_custom_call.1} parent=0 // pred_check
    _
  $region3: #{tpu_custom_call.1} parent=0 // pred_check_branch
    %14 = sbr.rel (0) target = $region5
  $region4: #{tpu_custom_call.1} parent=0 // pred_region
    _
  $region5: #{tpu_custom_call.1} parent=0 // pred_fallthru
    _
  // Predicated region
  $region6: #{tpu_custom_call.1} parent=0 // pred_check
    _
  $region7: #{tpu_custom_call.1} parent=0 // pred_check_branch
    %16 = sbr.rel (0) target = $region9
  $region8: #{tpu_custom_call.1} parent=0 // pred_region
    _
  $region9: #{tpu_custom_call.1} parent=0 // pred_fallthru
    _
  // Predicated region
  $region10: #{tpu_custom_call.1} parent=0 // pred_check
    _
  $region11: #{tpu_custom_call.1} parent=0 // pred_check_branch
    %18 = sbr.rel (0) target = $region13
  $region12: #{tpu_custom_call.1} parent=0 // pred_region
    _
  $region13: #{tpu_custom_call.1} parent=0 // pred_fallthru
    _
  // Predicated region
  $region14: #{tpu_custom_call.1} parent=0 // pred_check
    _
  $region15: #{tpu_custom_call.1} parent=0 // pred_check_branch
    %20 = sbr.rel (0) target = $region17
  $region16: #{tpu_custom_call.1} parent=0 // pred_region
    _
  $region17: #{tpu_custom_call.1} parent=0 // pred_fallthru
    _
  // Predicated region
  $region18: #{tpu_custom_call.1} parent=0 // pred_check
    _
  $region19: #{tpu_custom_call.1} parent=0 // pred_check_branch
    %22 = sbr.rel (0) target = $region21
  $region20: #{tpu_custom_call.1} parent=0 // pred_region
    _
  $region21: #{tpu_custom_call.1} parent=0 // pred_fallthru
    _
  // Predicated region
  $region22: #{tpu_custom_call.1} parent=0 // pred_check
    _
  $region23: #{tpu_custom_call.1} parent=0 // pred_check_branch
    %24 = sbr.rel (0) target = $region25
  $region24: #{tpu_custom_call.1} parent=0 // pred_region
    _
  $region25: #{tpu_custom_call.1} parent=0 // pred_fallthru
    _
  // Predicated region
  $region26: #{tpu_custom_call.1} parent=0 // pred_check
    _
  $region27: #{tpu_custom_call.1} parent=0 // pred_check_branch
    %26 = sbr.rel (0) target = $region29
  $region28: #{tpu_custom_call.1} parent=0 // pred_region
    _
  $region29: #{tpu_custom_call.1} parent=0 // pred_fallthru
    _
  %v28 = vld [vmem:[%s0] sm:$0xf]
  %v29 = vld [vmem:[%s0 + $0x4] sm:$0xf]
  %v30 = vld [vmem:[%s1] sm:$0xf]
  %v31 = vld [vmem:[%s1 + $0x4] sm:$0xf]
  %v32 = vld [vmem:[%s1 + $0x8] sm:$0xf]
  %v33 = vld [vmem:[%s1 + $0xc] sm:$0xf]
  %v34 = vld [vmem:[%s1 + $0x10] sm:$0xf]
  %v35 = vld [vmem:[%s1 + $0x14] sm:$0xf]
  %v36 = vld [vmem:[%s1 + $0x18] sm:$0xf]
  %v37 = vld [vmem:[%s1 + $0x1c] sm:$0xf]
  %v38 = vld [vmem:[%s1 + $0x20] sm:$0xf]
  %v39 = vld [vmem:[%s1 + $0x24] sm:$0xf]
  %v40 = vld [vmem:[%s1 + $0x28] sm:$0xf]
  %v41 = vld [vmem:[%s1 + $0x2c] sm:$0xf]
  %v42 = vld [vmem:[%s1 + $0x30] sm:$0xf]
  %v43 = vld [vmem:[%s1 + $0x34] sm:$0xf]
  %v44 = vld [vmem:[%s1 + $0x38] sm:$0xf]
  %v45 = vld [vmem:[%s1 + $0x3c] sm:$0xf]
  %v46 = vld [vmem:[%s2] sm:$0x1]
  %v48 = vperm.slane %v46, 0
  %v52 = vunpack.c.l.b16 %v28
  %v53 = vunpack.c.l.b16 %v29
  %v54 = vpack.c.b16 %v53, %v52
  %v72 = vunpack.c.l.b16 %v30
  %v73 = vunpack.c.l.b16 %v31
  %v74 = vunpack.c.l.b16 %v32
  %v75 = vunpack.c.l.b16 %v33
  %v76 = vunpack.c.l.b16 %v34
  %v77 = vunpack.c.l.b16 %v35
  %v78 = vunpack.c.l.b16 %v36
  %v79 = vunpack.c.l.b16 %v37
  %v80 = vunpack.c.l.b16 %v38
  %v81 = vunpack.c.l.b16 %v39
  %v82 = vunpack.c.l.b16 %v40
  %v83 = vunpack.c.l.b16 %v41
  %v84 = vunpack.c.l.b16 %v42
  %v85 = vunpack.c.l.b16 %v43
  %v86 = vunpack.c.l.b16 %v44
  %v87 = vunpack.c.l.b16 %v45
  %v88 = vpack.c.b16 %v73, %v72
  %v89 = vpack.c.b16 %v75, %v74
  %v90 = vpack.c.b16 %v77, %v76
  %v91 = vpack.c.b16 %v79, %v78
  %v92 = vpack.c.b16 %v81, %v80
  %v93 = vpack.c.b16 %v83, %v82
  %v94 = vpack.c.b16 %v85, %v84
  %v95 = vpack.c.b16 %v87, %v86
  %104 = vmatpush.bf16.msra.mxu0 %v95
  %105 = vmatpush.bf16.msra.mxu0 %v94
  %106 = vmatpush.bf16.msra.mxu0 %v93
  %107 = vmatpush.bf16.msra.mxu0 %v92
  %108 = vmatpush.bf16.msra.mxu0 %v91
  %109 = vmatpush.bf16.msra.mxu0 %v90
  %110 = vmatpush.bf16.msra.mxu0 %v89
  %111 = vmatpush.bf16.msra.mxu0 %v88
  %112 = vmatmul.bf16.gmra.mxu0 %v54
  %v113 = vpop.f32.mrf.mxu0
  %v114 = vadd.f32 %v48, %v113
  %v115 = vpop.f32.mrf.mxu0
  %v116 = vadd.f32 %v48, %v115
  %117 = vdwg.mxu0
  %v118 = vmax.f32 %v114, 0.0
  %v119 = vmax.f32 %v116, 0.0
  %v120 = vpack.c.bf16 %v119, %v118
  %v121 = vld [vmem:[%s3] sm:$0xf]
  %v122 = vld [vmem:[%s3 + $0x4] sm:$0xf]
  %v123 = vld [vmem:[%s3 + $0x8] sm:$0xf]
  %v124 = vld [vmem:[%s3 + $0xc] sm:$0xf]
  %v125 = vld [vmem:[%s3 + $0x10] sm:$0xf]
  %v126 = vld [vmem:[%s3 + $0x14] sm:$0xf]
  %v127 = vld [vmem:[%s3 + $0x18] sm:$0xf]
  %v128 = vld [vmem:[%s3 + $0x1c] sm:$0xf]
  %v129 = vld [vmem:[%s4] sm:$0x1]
  %v131 = vperm.slane %v129, 0
  %v141 = vunpack.c.l.b16 %v121
  %v142 = vunpack.c.l.b16 %v122
  %v143 = vunpack.c.l.b16 %v123
  %v144 = vunpack.c.l.b16 %v124
  %v145 = vunpack.c.l.b16 %v125
  %v146 = vunpack.c.l.b16 %v126
  %v147 = vunpack.c.l.b16 %v127
  %v148 = vunpack.c.l.b16 %v128
  %v149 = vpack.c.b16 %v142, %v141
  %v150 = vpack.c.b16 %v144, %v143
  %v151 = vpack.c.b16 %v146, %v145
  %v152 = vpack.c.b16 %v148, %v147
  %vm157 = vcmask 523264
  %v159 = vsel %vm157, %v120, 0
  %161 = vmatpush.bf16.msra.mxu0 0
  %162 = vmatpush.bf16.msra.mxu0 0
  %163 = vmatpush.bf16.msra.mxu0 0
  %164 = vmatpush.bf16.msra.mxu0 0
  %165 = vmatpush.bf16.msra.mxu0 %v152
  %166 = vmatpush.bf16.msra.mxu0 %v151
  %167 = vmatpush.bf16.msra.mxu0 %v150
  %168 = vmatpush.bf16.msra.mxu0 %v149
  %169 = vmatmul.bf16.gmra.mxu0 %v159
  %v170 = vpop.f32.mrf.mxu0
  %v171 = vadd.f32 %v131, %v170
  %v172 = vpop.f32.mrf.mxu0
  %v173 = vadd.f32 %v131, %v172
  %174 = vdwg.mxu0
  %v175 = vmax.f32 %v171, 0.0
  %v176 = vmax.f32 %v173, 0.0
  %v177 = vld [vmem:[%s5] sm:$0x1]
  %v179 = vperm.slane %v177, 0
  %v181 = vmul.f32 %v175, %v179
  %v182 = vmul.f32 %v176, %v179
  %vm183 = vcmask 261120
  %v184 = vsel %vm183, %v181, 0.0
  %185 = vadd.xlane.f32.xlu0 %v184
  %v186 = vpop.xlane.xlu0 %185
  %v187 = vsel %vm183, %v182, 0.0
  %188 = vadd.xlane.f32.xlu0 %v187
  %v189 = vpop.xlane.xlu0 %188
  %s190 = sld [smem:[#allocation2]]
  %v191 = vstv %s190
  %v192 = vadd.f32 %v186, %v191
  %v193 = vadd.f32 %v189, %v191
  %v194 = vxor.u32 %v192, 2147483648
  %v195 = vxor.u32 %v193, 2147483648
  %v196 = vmul.f32 %v194, 1.442695
  %v197 = vpow.pop %v196
  %v198 = vmul.f32 %v195, 1.442695
  %v199 = vpow.pop %v198
  %v200 = vadd.f32 %v197, 1.0
  %v201 = vadd.f32 %v199, 1.0
  %v202 = vrcp.pop %v200
  %v203 = vmul.f32 %v200, %v202
  %v204 = vsub.f32 1.0, %v203
  %v205 = vmul.f32 %v202, %v204
  %v206 = vadd.f32 %v202, %v205
  %vm207 = vweird.f32 %v200
  %vm208 = vweird.f32 %v202
  %vm209 = vmor %vm207, %vm208
  %v210 = vsel %vm209, %v202, %v206
  %v211 = vand.u32 2147483647, %v200
  %vm212 = vcmp.eq.f32.partialorder %v211, 8.507059e+37
  %v213 = vand.u32 %v200, 2147483648
  %v214 = vor.u32 1.1754944e-38, %v213
  %v215 = vsel %vm212, %v214, %v210
  %v216 = vmul.f32 1.0, %v215
  %v217 = vrcp.pop %v201
  %v218 = vmul.f32 %v201, %v217
  %v219 = vsub.f32 1.0, %v218
  %v220 = vmul.f32 %v217, %v219
  %v221 = vadd.f32 %v217, %v220
  %vm222 = vweird.f32 %v201
  %vm223 = vweird.f32 %v217
  %vm224 = vmor %vm222, %vm223
  %v225 = vsel %vm224, %v217, %v221
  %v226 = vand.u32 2147483647, %v201
  %vm227 = vcmp.eq.f32.partialorder %v226, 8.507059e+37
  %v228 = vand.u32 %v201, 2147483648
  %v229 = vor.u32 1.1754944e-38, %v228
  %v230 = vsel %vm227, %v229, %v225
  %v231 = vmul.f32 1.0, %v230
  %vm232 = vcmask 7168
  %233 = vst.msk [vmem:[%s7] sm:$0xff] %vm232, %v216
  %234 = vst.msk [vmem:[%s7 + $0x8] sm:$0xff] %vm232, %v231
  // Predicated region
  $region30: #{tpu_custom_call.1} parent=0 // pred_check
    _
  $region31: #{tpu_custom_call.1} parent=0 // pred_check_branch
    %236 = sbr.rel (0) target = $region33
  $region32: #{tpu_custom_call.1} parent=0 // pred_region
    _
  $region33: #{tpu_custom_call.1} parent=0 // pred_fallthru
    _
  // Predicated region
  $region34: #{tpu_custom_call.1} parent=0 // pred_check
    _
  $region35: #{tpu_custom_call.1} parent=0 // pred_check_branch
    %238 = sbr.rel (0) target = $region37
  $region36: #{tpu_custom_call.1} parent=0 // pred_region
    _
  $region37: #{tpu_custom_call.1} parent=0 // pred_fallthru
    _

</llo_original>
